<compile_context>
chip_gen: v5e
topology: v5e:2x2
jax: 0.10.0
libtpu: 0.0.40
codegen_flags: <defaults>
</compile_context>

<pallas_src>
import jax
import jax.numpy as jnp
from jax.experimental import pallas as pl
from jax.experimental.pallas import tpu as pltpu


def _tpu_vmem_capacity_bytes():
    """Best-effort VMEM capacity query; conservative (v7x-sized) default on failure."""
    try:
        info = pltpu.get_tpu_info()
        cap = getattr(info, "vmem_capacity_bytes", None)
        if cap:
            return int(cap)
    except Exception:
        pass
    return 64 << 20


def _choose_cols(B, J, H, W):
    """Pick a lane-dense 2-D (rows, cols) view of the flat B*J*H*W problem."""
    HW = H * W
    N = B * J * HW
    if HW % 128 == 0:
        return B * J, HW
    if N % 128 == 0:
        for c in (4096, 2048, 1024, 512, 256, 128):
            if N % c == 0:
                return N // c, c
    # TODO(synk): N not 128-aligned -> lane-padded (R, HW) fallback.
    return B * J, HW


def _choose_tile_rows(num_rows, row_bytes, target_tile_bytes):
    """Big row tile (mem-bound), multiple of 8; prefer a divisor near the target."""
    max_rows = max(8, target_tile_bytes // max(1, row_bytes))
    if num_rows <= max_rows:
        return num_rows                       # one full-extent block
    cand = max(8, (max_rows // 8) * 8)
    c = cand
    # Only accept a multiple-of-8 divisor if it stays within 2x of the target;
    # otherwise take the big tile and mask the partial last block.
    while c >= max(8, cand // 2):
        if num_rows % c == 0:
            return c
        c -= 8
    return cand


def _make_kernel(tile_r, cols, total_rows, tiles_per_core, acc_rows,
                 cast_to_f32, needs_mask, unroll):
    num_groups = tile_r // acc_rows

    def kernel(pred_ref, gt_ref, out_ref, acc_ref):
        c = pl.program_id(0)
        i = pl.program_id(1)

        @pl.when(i == 0)
        def _init():
            acc_ref[...] = jnp.zeros_like(acc_ref)

        # Unclamped global row offset of this block (used only for masking).
        row0 = (c * tiles_per_core + i) * tile_r

        def accumulate(start):
            a = pred_ref[pl.ds(start, acc_rows), :]
            b = gt_ref[pl.ds(start, acc_rows), :]
            if cast_to_f32:
                # Cast BEFORE subtracting: keeps mantissa bits of small
                # pred-gt differences for bf16/f16 inputs.
                a = a.astype(jnp.float32)
                b = b.astype(jnp.float32)
            d = a - b
            if needs_mask:
                rows = (jax.lax.broadcasted_iota(jnp.int32, (acc_rows, 1), 0)
                        + row0 + start)
                d = jnp.where(rows < total_rows, d, 0.0)
            acc_ref[...] += d * d

        if num_groups == 1:
            accumulate(0)
        else:
            def body(g, carry):
                accumulate(pl.multiple_of(g * acc_rows, acc_rows))
                return carry
            jax.lax.fori_loop(0, num_groups, body, 0, unroll=unroll)

        @pl.when(i == pl.num_programs(1) - 1)
        def _finalize():
            # Single cross-lane reduce per core, once per call.
            out_ref[0, 0] = jnp.sum(acc_ref[...])

    return kernel


def joints_mse_loss(output, target):
    """Pallas implementation of JointsMSELoss(use_target_weight=False).forward."""
    assert output.shape == target.shape
    B, J, H, W = output.shape
    N = B * J * H * W
    itemsize = jnp.dtype(output.dtype).itemsize

    rows, cols = _choose_cols(B, J, H, W)
    # Zero-copy metadata reshape of the contiguous NCHW layout.
    pred = output.reshape(rows, cols)
    gt = target.reshape(rows, cols)

    # Generation-aware tiling / VMEM budget (v7x: 64 MiB VMEM per TensorCore).
    vmem_cap = _tpu_vmem_capacity_bytes()
    small_vmem = vmem_cap <= (64 << 20)
    target_tile_bytes = (4 << 20) if small_vmem else (8 << 20)
    vmem_limit_cap = (36 << 20) if small_vmem else (48 << 20)

    tile_r = _choose_tile_rows(rows, cols * itemsize, target_tile_bytes)
    num_tiles = pl.cdiv(rows, tile_r)

    # Megacore split: leading "parallel" axis (2 TCs on v7x); skip when there is
    # only one tile of work.
    num_cores = 2 if num_tiles >= 2 else 1
    tiles_per_core = pl.cdiv(num_tiles, num_cores)
    coverage_rows = num_cores * tiles_per_core * tile_r
    needs_mask = coverage_rows != rows

    acc_rows = 8 if (tile_r % 8 == 0) else tile_r
    num_groups = tile_r // acc_rows
    unroll = max(1, min(4, num_groups))

    if num_cores * tiles_per_core > num_tiles:
        def in_map(c, i):
            # Clamp so the extra (fully masked) block never DMAs out of bounds.
            return (jnp.minimum(c * tiles_per_core + i, num_tiles - 1), 0)
    else:
        def in_map(c, i):
            return (c * tiles_per_core + i, 0)

    kernel = _make_kernel(
        tile_r, cols, rows, tiles_per_core, acc_rows,
        output.dtype != jnp.float32, needs_mask, unroll,
    )

    tile_bytes = tile_r * cols * itemsize
    vmem_needed = 2 * 2 * tile_bytes + acc_rows * cols * 4 + (4 << 20)
    vmem_limit = int(min(max(vmem_needed, 24 << 20), vmem_limit_cap))

    partials = pl.pallas_call(
        kernel,
        out_shape=jax.ShapeDtypeStruct((num_cores, 1), jnp.float32),
        grid_spec=pltpu.PrefetchScalarGridSpec(
            num_scalar_prefetch=0,
            grid=(num_cores, tiles_per_core),
            in_specs=[
                pl.BlockSpec((tile_r, cols), in_map),
                pl.BlockSpec((tile_r, cols), in_map),
            ],
            out_specs=pl.BlockSpec((1, 1), lambda c, i: (c, 0),
                                   memory_space=pltpu.SMEM),
            scratch_shapes=[pltpu.VMEM((acc_rows, cols), jnp.float32)],
        ),
        compiler_params=pltpu.CompilerParams(
            dimension_semantics=("parallel", "arbitrary"),
            vmem_limit_bytes=vmem_limit,
        ),
        cost_estimate=pl.CostEstimate(
            flops=3 * N,
            transcendentals=0,
            bytes_accessed=2 * N * itemsize + 4 * num_cores,
        ),
    )(pred, gt)

    # Per-joint mean averaged over joints == one global mean (equal element counts),
    # so a single division by B*J*H*W is exact.
    return jnp.sum(partials) * (1.0 / float(N))


if __name__ == "__main__":
    key = jax.random.PRNGKey(0)
    k1, k2 = jax.random.split(key)

    B, J, H, W = 2, 4, 16, 16  # batch=2, num_joints=4, 16x16 heatmaps
    output = jax.random.normal(k1, (B, J, H, W), dtype=jnp.float32)
    target = jax.random.normal(k2, (B, J, H, W), dtype=jnp.float32)

    loss = joints_mse_loss(output, target)
    jax.block_until_ready(loss)

    # Pure-JAX reference: per-joint MSE, averaged over joints (PyTorch semantics).
    diff = output.reshape(B, J, -1) - target.reshape(B, J, -1)
    ref = jnp.mean(jnp.mean(diff * diff, axis=(0, 2)))
    assert jnp.allclose(loss, ref, rtol=1e-5, atol=1e-6), (loss, ref)

    print("KERNEL_OK")
</pallas_src>

<mosaic_0001>
module attributes {stable_mosaic.version = 11 : i64} {
  func.func @kernel(%arg0: i32, %arg1: i32, %arg2: memref<8x256xf32, #tpu.memory_space<vmem>>, %arg3: memref<8x256xf32, #tpu.memory_space<vmem>>, %arg4: memref<1x1xf32, #tpu.memory_space<smem>>, %arg5: memref<8x256xf32, #tpu.memory_space<vmem>>) attributes {dimension_semantics = [#tpu.dimension_semantics<parallel>, #tpu.dimension_semantics<arbitrary>], iteration_bounds = array<i64: 1, 1>, scalar_prefetch = 0 : i64, scratch_operands = 1 : i64, tpu.core_type = #tpu.core_type<tc>, window_params = [{transform_indices = @transform_0, window_bounds = array<i64: 8, 256>}, {transform_indices = @transform_1, window_bounds = array<i64: 8, 256>}, {transform_indices = @transform_2, window_bounds = array<i64: 1, 1>}]} {
    %c0_i32 = arith.constant 0 : i32
    %0 = arith.cmpi eq, %arg1, %c0_i32 : i32
    %1 = arith.extui %0 : i1 to i32
    %c0_i32_0 = arith.constant 0 : i32
    %2 = arith.cmpi ne, %1, %c0_i32_0 : i32
    scf.if %2 {
      %cst = arith.constant 0.000000e+00 : f32
      %13 = vector.broadcast %cst : f32 to vector<8x256xf32>
      %c0_10 = arith.constant 0 : index
      %c0_11 = arith.constant 0 : index
      %14 = vector.load %arg5[%c0_10, %c0_11] : memref<8x256xf32, #tpu.memory_space<vmem>>, vector<8x256xf32>
      tpu.vector_store %arg5[%c0_10, %c0_11], %13 {strides = array<i32>} : memref<8x256xf32, #tpu.memory_space<vmem>>, vector<8x256xf32>,
    } else {
    }
    %c0 = arith.constant 0 : index
    %c0_1 = arith.constant 0 : index
    %3 = vector.load %arg2[%c0, %c0_1] : memref<8x256xf32, #tpu.memory_space<vmem>>, vector<8x256xf32>
    %c0_2 = arith.constant 0 : index
    %c0_3 = arith.constant 0 : index
    %4 = vector.load %arg3[%c0_2, %c0_3] : memref<8x256xf32, #tpu.memory_space<vmem>>, vector<8x256xf32>
    %5 = arith.subf %3, %4 : vector<8x256xf32>
    %c0_4 = arith.constant 0 : index
    %c0_5 = arith.constant 0 : index
    %6 = vector.load %arg5[%c0_4, %c0_5] : memref<8x256xf32, #tpu.memory_space<vmem>>, vector<8x256xf32>
    %7 = arith.mulf %5, %5 : vector<8x256xf32>
    %8 = arith.addf %6, %7 : vector<8x256xf32>
    %c0_6 = arith.constant 0 : index
    %c0_7 = arith.constant 0 : index
    %9 = vector.load %arg5[%c0_6, %c0_7] : memref<8x256xf32, #tpu.memory_space<vmem>>, vector<8x256xf32>
    tpu.vector_store %arg5[%c0_6, %c0_7], %8 {strides = array<i32>} : memref<8x256xf32, #tpu.memory_space<vmem>>, vector<8x256xf32>,
    %c0_i32_8 = arith.constant 0 : i32
    %10 = arith.cmpi eq, %arg1, %c0_i32_8 : i32
    %11 = arith.extui %10 : i1 to i32
    %c0_i32_9 = arith.constant 0 : i32
    %12 = arith.cmpi ne, %11, %c0_i32_9 : i32
    scf.if %12 {
      %c0_10 = arith.constant 0 : index
      %c0_11 = arith.constant 0 : index
      %13 = vector.load %arg5[%c0_10, %c0_11] : memref<8x256xf32, #tpu.memory_space<vmem>>, vector<8x256xf32>
      %14 = vector.shape_cast %13 : vector<8x256xf32> to vector<1x8x256xf32>
      %cst = arith.constant dense<0.000000e+00> : vector<1xf32>
      %15 = vector.multi_reduction <add>, %14, %cst [1, 2] : vector<1x8x256xf32> to vector<1xf32>
      %16 = vector.shape_cast %15 : vector<1xf32> to vector<1x1x1xf32>
      %17 = vector.extract %16[0, 0, 0] : f32 from vector<1x1x1xf32>
      %c0_12 = arith.constant 0 : index
      %c0_13 = arith.constant 0 : index
      %18 = memref.load %arg4[%c0_12, %c0_13] : memref<1x1xf32, #tpu.memory_space<smem>>
      memref.store %17, %arg4[%c0_12, %c0_13] : memref<1x1xf32, #tpu.memory_space<smem>>
    } else {
    }
    return
  }
  func.func @transform_0(%arg0: i32, %arg1: i32) -> (i32, i32) {
    %c1_i32 = arith.constant 1 : i32
    %0 = arith.muli %arg0, %c1_i32 : i32
    %1 = arith.addi %0, %arg1 : i32
    %c0_i32 = arith.constant 0 : i32
    %c0_i32_0 = arith.constant 0 : i32
    return %1, %c0_i32 : i32, i32
  }
  func.func @transform_1(%arg0: i32, %arg1: i32) -> (i32, i32) {
    %c1_i32 = arith.constant 1 : i32
    %0 = arith.muli %arg0, %c1_i32 : i32
    %1 = arith.addi %0, %arg1 : i32
    %c0_i32 = arith.constant 0 : i32
    %c0_i32_0 = arith.constant 0 : i32
    return %1, %c0_i32 : i32, i32
  }
  func.func @transform_2(%arg0: i32, %arg1: i32) -> (i32, i32) {
    %c0_i32 = arith.constant 0 : i32
    %c0_i32_0 = arith.constant 0 : i32
    return %arg0, %c0_i32 : i32, i32
  }
}

</mosaic_0001>

<llo_original>
// kernel: tpu_custom_call.1
$region0: #{tpu_custom_call.1}
  #allocation0 [shape = 'u32[]', space=smem, size = 0x4, offset = 0x4, fixed_abs, tag = 'smem constant byte address 0x4 - core index']
  #allocation1 [shape = 'u32[72,128]{1,0:T(1,128)}', space=vmem, size = 0x9000, scoped, tag = 'internal scratch']
  #allocation2 [shape = 'f32[8,256]{1,0:T(8,128)}', space=vmem, size = 0x2000, scoped, tag = 'scratch operand']
  %s0 = inlined_call_operand.hbm [shape: f32[8,256], index: 0, kind: input, shape index: {}]
  %s1 = inlined_call_operand.hbm [shape: f32[8,256], index: 1, kind: input, shape index: {}]
  %s2 = inlined_call_operand.hbm [shape: f32[1,1], index: 2, kind: output, shape index: {}]
  %s3 = sld [smem:[#allocation0]]
  $region34: #{tpu_custom_call.1} parent=0
    _
  %s5 = ssub.s32 1, %s3
  %s6 = scalar_select 0, %s5, %s3
  $region1: #{tpu_custom_call.1} parent=0
    #allocation3 [shape = 'u8[8192]{0}', space=vmem, size = 0x2000, scoped, tag = 'input window, operand 0, single buffered']
    #allocation4 [shape = 's32[1]{0}', space=sflag, size = 0x4, scoped, tag = 'scoped memory for tpu_custom_call.1']
    #allocation5 [shape = 's32[1]{0}', space=sflag, size = 0x4, scoped, tag = 'scoped memory for tpu_custom_call.1']
    #allocation6 [shape = 'u8[8192]{0}', space=vmem, size = 0x2000, scoped, tag = 'input window, operand 1, single buffered']
    #allocation7 [shape = 's32[1]{0}', space=sflag, size = 0x4, scoped, tag = 'scoped memory for tpu_custom_call.1']
    #allocation8 [shape = 'u8[512]{0}', space=smem, size = 0x200, scoped, tag = 'output window, operand 0, single buffered']
    %7 = vsyncpa [#allocation4], 0
    %8 = vsyncpa [#allocation7], 0
    %9 = vsyncpa [#allocation5], 0
    // Predicated region
    $region2: #{tpu_custom_call.1} parent=1 // pred_check
      _
    $region3: #{tpu_custom_call.1} parent=1 // pred_check_branch
      %11 = sbr.rel (0) target = $region5
    $region4: #{tpu_custom_call.1} parent=1 // pred_region
      %s12 = sadd.s32 0, 0
      %14 = vsyncadd [#allocation4], 0
      %s15 = smul.addr %s12, 2
      %s16 = smul.addr %s15, 8
      %s17 = scalar_lea.hbm %s0, %s16
      %s19 = sshll.u32 %s17, 4
      %s20 = int_to_ptr.hbm [resolvable:$true] %s19
      %s21 = sshll.u32 [#allocation3], 4
      %s22 = int_to_ptr.vmem [resolvable:$true] %s21
      %24 = dma.hbm_to_vmem [thread:$0]  %s20, 256, %s22, [#allocation4]
    $region5: #{tpu_custom_call.1} parent=1 // pred_fallthru
      _
    // Predicated region
    $region6: #{tpu_custom_call.1} parent=1 // pred_check
      _
    $region7: #{tpu_custom_call.1} parent=1 // pred_check_branch
      %26 = sbr.rel (0) target = $region9
    $region8: #{tpu_custom_call.1} parent=1 // pred_region
      %s27 = sadd.s32 0, 0
      %29 = vsyncadd [#allocation7], 0
      %s30 = smul.addr %s27, 2
      %s31 = smul.addr %s30, 8
      %s32 = scalar_lea.hbm %s1, %s31
      %s34 = sshll.u32 %s32, 4
      %s35 = int_to_ptr.hbm [resolvable:$true] %s34
      %s36 = sshll.u32 [#allocation6], 4
      %s37 = int_to_ptr.vmem [resolvable:$true] %s36
      %39 = dma.hbm_to_vmem [thread:$0]  %s35, 256, %s37, [#allocation7]
    $region9: #{tpu_custom_call.1} parent=1 // pred_fallthru
      _
    // Predicated region
    $region10: #{tpu_custom_call.1} parent=1 // pred_check
      _
    $region11: #{tpu_custom_call.1} parent=1 // pred_check_branch
      %41 = sbr.rel (0) target = $region13
    $region12: #{tpu_custom_call.1} parent=1 // pred_region
      %43 = dma.done [#allocation4], 256
    $region13: #{tpu_custom_call.1} parent=1 // pred_fallthru
      _
    // Predicated region
    $region14: #{tpu_custom_call.1} parent=1 // pred_check
      _
    $region15: #{tpu_custom_call.1} parent=1 // pred_check_branch
      %45 = sbr.rel (0) target = $region17
    $region16: #{tpu_custom_call.1} parent=1 // pred_region
      %47 = dma.done [#allocation7], 256
    $region17: #{tpu_custom_call.1} parent=1 // pred_fallthru
      _
    %s48 = sadd.s32 0, 0
    %s49 = sadd.s32 0, 0
    %p50 = scmp.eq.s32.totalorder 0, 0
    // Predicated region
    $region18: #{tpu_custom_call.1} parent=1 // pred_check
      %p51 = pneg %p50
    $region19: #{tpu_custom_call.1} parent=1 // pred_check_branch
      %53 = sbr.rel (%p51) target = $region21
    $region20: #{tpu_custom_call.1} parent=1 // pred_region
      %54 = vst [vmem:[#allocation2] sm:$0xff] 0.0
      %55 = vst [vmem:[#allocation2 + $0x8] sm:$0xff] 0.0
    $region21: #{tpu_custom_call.1} parent=1 // pred_fallthru
      _
    %v56 = vld [vmem:[#allocation3] sm:$0xff]
    %v57 = vld [vmem:[#allocation3 + $0x8] sm:$0xff]
    %v58 = vld [vmem:[#allocation6] sm:$0xff]
    %v59 = vld [vmem:[#allocation6 + $0x8] sm:$0xff]
    %v60 = vsub.f32 %v56, %v58
    %v61 = vsub.f32 %v57, %v59
    %v62 = vld [vmem:[#allocation2] sm:$0xff]
    %v63 = vld [vmem:[#allocation2 + $0x8] sm:$0xff]
    %v64 = vmul.f32 %v60, %v60
    %v65 = vmul.f32 %v61, %v61
    %v66 = vadd.f32 %v62, %v64
    %v67 = vadd.f32 %v63, %v65
    %68 = vst [vmem:[#allocation2] sm:$0xff] %v66
    %69 = vst [vmem:[#allocation2 + $0x8] sm:$0xff] %v67
    // Predicated region
    $region22: #{tpu_custom_call.1} parent=1 // pred_check
      %p70 = pneg %p50
    $region23: #{tpu_custom_call.1} parent=1 // pred_check_branch
      %72 = sbr.rel (%p70) target = $region25
    $region24: #{tpu_custom_call.1} parent=1 // pred_region
      %v73 = vld [vmem:[#allocation2] sm:$0xff]
      %v74 = vld [vmem:[#allocation2 + $0x8] sm:$0xff]
      %v75 = vadd.f32 %v73, %v74
      %76 = vadd.xlane.f32.xlu0 %v75
      %v77 = vpop.xlane.xlu0 %76
      %v78 = vrot.slane %v77, 4
      %v79 = vadd.f32 %v77, %v78
      %v80 = vrot.slane %v79, 2
      %v81 = vadd.f32 %v79, %v80
      %v82 = vrot.slane %v81, 1
      %v83 = vadd.f32 %v81, %v82
      %s84 = vtos %v83
      %s85 = scalar_lea.smem [#allocation8], 0
      %86 = sst [smem:[%s85]] %s84
    $region25: #{tpu_custom_call.1} parent=1 // pred_fallthru
      _
    // Predicated region
    $region26: #{tpu_custom_call.1} parent=1 // pred_check
      _
    $region27: #{tpu_custom_call.1} parent=1 // pred_check_branch
      %88 = sbr.rel (0) target = $region29
    $region28: #{tpu_custom_call.1} parent=1 // pred_region
      %90 = vsyncadd [#allocation5], 0
      %s92 = sshll.u32 %s2, 4
      %s93 = int_to_ptr.hbm [resolvable:$true] %s92
      %95 = dma.smem_to_hbm [#allocation8], 16, %s93, [#allocation5]
    $region29: #{tpu_custom_call.1} parent=1 // pred_fallthru
      _
    // Predicated region
    $region30: #{tpu_custom_call.1} parent=1 // pred_check
      _
    $region31: #{tpu_custom_call.1} parent=1 // pred_check_branch
      %97 = sbr.rel (0) target = $region33
    $region32: #{tpu_custom_call.1} parent=1 // pred_region
      %99 = dma.done [#allocation5], 16
    $region33: #{tpu_custom_call.1} parent=1 // pred_fallthru
      _
    %100 = sfence
    %101 = vsyncpa [#allocation4], 1
    %102 = vsyncpa [#allocation7], 1
    %103 = vsyncpa [#allocation5], 1

</llo_original>
